<compile_context>
chip_gen: v7x
topology: tpu7x:2x2x1
jax: 0.10.0
libtpu: 0.0.40
codegen_flags: <defaults>
</compile_context>

<pallas_src>
import math

import jax
import jax.numpy as jnp
from jax.experimental import pallas as pl
from jax.experimental.pallas import tpu as pltpu


def create_positional_encoding(channels: int, length: int) -> jnp.ndarray:
    """Pure-JAX port of the PyTorch static method.

    NOTE: like the PyTorch code, an odd `channels` is rounded down to an even
    number, so the buffer then has `channels - 1` rows and the forward add
    requires an even channel count (the torch broadcast would fail too).
    """
    if channels % 2 == 1:
        channels -= 1
    position = jnp.arange(length, dtype=jnp.float32)[:, None]            # (L, 1)
    div_term = jnp.exp(
        jnp.arange(0, channels, 2, dtype=jnp.float32)
        * -(math.log(10000.0) / channels)
    )                                                                    # (C/2,)
    args = position * div_term                                           # (L, C/2)
    pe = jnp.zeros((length, channels), dtype=jnp.float32)
    pe = pe.at[:, 0::2].set(jnp.sin(args))
    pe = pe.at[:, 1::2].set(jnp.cos(args))
    return pe.T[None, :, :]                                              # (1, C, L)


def _add_pe_kernel(x_ref, pe_ref, o_ref):
    # x_ref/o_ref: (TB, TL) tile of the flattened (B, C*L) activations.
    # pe_ref:      (1, TL) tile of the flattened PE, broadcast over rows.
    o_ref[...] = x_ref[...] + pe_ref[...]


def _choose_tiles(rows: int, cols: int, itemsize: int):
    """Pick a ~2 MiB, lane-dense block (TB, TL) for the flattened (rows, cols) add.

    Block dims are either multiples of (8, 128) or equal to the full array dim,
    so every choice satisfies the TPU layout constraint.
    """
    target = max((2 * 1024 * 1024) // itemsize, 1024)        # elements per x block
    # Sublane (row) tile: multiple of 8 unless it covers every row.
    tb = min(rows, max(1, target // max(cols, 128)))
    if tb < rows:
        tb = min(rows, max(8, (tb // 8) * 8))
    # Lane (col) tile: fill the remaining budget; multiple of 128 unless it
    # covers the whole flattened row (full-dim blocks are always legal).
    tl_budget = max(128, target // max(tb, 1))
    tl = cols if cols <= tl_budget else (tl_budget // 128) * 128
    return tb, tl


def sinusoidal_positional_encoding(x: jnp.ndarray, pe: jnp.ndarray) -> jnp.ndarray:
    """x: (B, C, L), pe: (1, C, L) -> x + pe via a Pallas TPU kernel."""
    B, C, L = x.shape
    if pe.shape != (1, C, L):
        raise ValueError(
            f"pe shape {pe.shape} incompatible with x {x.shape}; note that an odd "
            "channel count is rounded down when building the encoding (matching "
            "the reference PyTorch module), so `channels` must be even."
        )

    # One dtype policy: keep everything in the activation dtype.
    pe = pe.astype(x.dtype)

    # Free (contiguous) reshape to 2D so blocks are big and lane-dense.
    rows, cols = B, C * L
    x2 = x.reshape(rows, cols)
    pe2 = pe.reshape(1, cols)

    tb, tl = _choose_tiles(rows, cols, jnp.dtype(x.dtype).itemsize)
    n_row = pl.cdiv(rows, tb)
    n_lane = pl.cdiv(cols, tl)

    out2 = pl.pallas_call(
        _add_pe_kernel,
        out_shape=jax.ShapeDtypeStruct((rows, cols), x.dtype),
        grid_spec=pltpu.PrefetchScalarGridSpec(
            num_scalar_prefetch=0,
            # Lane-block index j is the OUTER grid axis: the PE block index is
            # constant across the inner row loop, so Pallas fetches each PE
            # block once per lane block instead of once per grid step.
            grid=(n_lane, n_row),
            in_specs=[
                pl.BlockSpec((tb, tl), lambda j, i: (i, j)),   # x tile
                pl.BlockSpec((1, tl), lambda j, i: (0, j)),    # PE tile (row bcast)
            ],
            out_specs=pl.BlockSpec((tb, tl), lambda j, i: (i, j)),
        ),
        compiler_params=pltpu.CompilerParams(
            # Independent axes -> v7x can split across its 2 TensorCores;
            # near-neutral (but harmless) on single-TC v5e/v6e.
            dimension_semantics=("parallel", "parallel"),
            # Blocks are <= ~2 MiB, so the double-buffered footprint sits well
            # under 32 MiB on every generation (incl. v7x's 64 MiB VMEM) while
            # lifting v5e's 16 MiB default scoped limit.
            vmem_limit_bytes=32 * 1024 * 1024,
        ),
        # NOTE: input_output_aliases={0: 0} would do the add in place (drops the
        # separate output allocation) but donates x's buffer; left off so the
        # wrapper stays safe when the caller still needs x.
        # NOTE: a standalone broadcast add can never beat the 2*B*C*L-byte HBM
        # roofline; if this sits next to another elementwise op in the model,
        # prefer fusing the PE add into that kernel instead of a separate pass.
    )(x2, pe2)

    return out2.reshape(B, C, L)


if __name__ == "__main__":
    # Small shapes consistent with the module: x is (batch, channels, length).
    B, C, L = 2, 8, 128

    key = jax.random.PRNGKey(0)
    x = jax.random.normal(key, (B, C, L), dtype=jnp.float32)

    # Deterministic "parameter" (requires_grad=False buffer in PyTorch).
    pe = create_positional_encoding(C, L)

    out = sinusoidal_positional_encoding(x, pe)
    out = jax.block_until_ready(out)

    # Correctness check against plain-JAX reference (broadcast add).
    ref = x + pe.astype(x.dtype)
    assert out.shape == (B, C, L)
    assert jnp.allclose(out, ref, atol=1e-6), "mismatch vs reference"

    print("KERNEL_OK")
</pallas_src>

<mosaic_0001>
module attributes {stable_mosaic.version = 11 : i64} {
  func.func @_add_pe_kernel(%arg0: i32, %arg1: i32, %arg2: memref<2x1024xf32, #tpu.memory_space<vmem>>, %arg3: memref<1x1024xf32, #tpu.memory_space<vmem>>, %arg4: memref<2x1024xf32, #tpu.memory_space<vmem>>) attributes {dimension_semantics = [#tpu.dimension_semantics<parallel>, #tpu.dimension_semantics<parallel>], iteration_bounds = array<i64: 1, 1>, scalar_prefetch = 0 : i64, scratch_operands = 0 : i64, tpu.core_type = #tpu.core_type<tc>, window_params = [{transform_indices = @transform_0, window_bounds = array<i64: 2, 1024>}, {transform_indices = @transform_1, window_bounds = array<i64: 1, 1024>}, {transform_indices = @transform_2, window_bounds = array<i64: 2, 1024>}]} {
    %c0 = arith.constant 0 : index
    %c0_0 = arith.constant 0 : index
    %0 = vector.load %arg2[%c0, %c0_0] : memref<2x1024xf32, #tpu.memory_space<vmem>>, vector<2x1024xf32>
    %c0_1 = arith.constant 0 : index
    %c0_2 = arith.constant 0 : index
    %1 = vector.load %arg3[%c0_1, %c0_2] : memref<1x1024xf32, #tpu.memory_space<vmem>>, vector<1x1024xf32>
    %2 = vector.broadcast %1 : vector<1x1024xf32> to vector<2x1024xf32>
    %3 = arith.addf %0, %2 : vector<2x1024xf32>
    %c0_3 = arith.constant 0 : index
    %c0_4 = arith.constant 0 : index
    %4 = vector.load %arg4[%c0_3, %c0_4] : memref<2x1024xf32, #tpu.memory_space<vmem>>, vector<2x1024xf32>
    tpu.vector_store %arg4[%c0_3, %c0_4], %3 {strides = array<i32>} : memref<2x1024xf32, #tpu.memory_space<vmem>>, vector<2x1024xf32>,
    return
  }
  func.func @transform_0(%arg0: i32, %arg1: i32) -> (i32, i32) {
    %c0_i32 = arith.constant 0 : i32
    return %arg1, %arg0 : i32, i32
  }
  func.func @transform_1(%arg0: i32, %arg1: i32) -> (i32, i32) {
    %c0_i32 = arith.constant 0 : i32
    %c0_i32_0 = arith.constant 0 : i32
    return %c0_i32, %arg0 : i32, i32
  }
  func.func @transform_2(%arg0: i32, %arg1: i32) -> (i32, i32) {
    %c0_i32 = arith.constant 0 : i32
    return %arg1, %arg0 : i32, i32
  }
}

</mosaic_0001>

<llo_original>
// kernel: tpu_custom_call.1
$region0: #{tpu_custom_call.1}
  #allocation0 [shape = 'u32[]', space=smem, size = 0x4, offset = 0x4, fixed_abs, tag = 'smem constant byte address 0x4 - core index']
  #allocation1 [shape = 'u32[144,128]{1,0:T(1,128)}', space=vmem, size = 0x12000, scoped, tag = 'internal scratch']
  %s0 = inlined_call_operand.hbm [shape: f32[2,1024], index: 0, kind: input, shape index: {}]
  %s1 = inlined_call_operand.hbm [shape: f32[1,1024], index: 1, kind: input, shape index: {}]
  %s2 = inlined_call_operand.hbm [shape: f32[2,1024], index: 2, kind: output, shape index: {}]
  %s3 = sld [smem:[#allocation0]]
  $region26: #{tpu_custom_call.1} parent=0
    _
  %s5 = ssub.s32 1, %s3
  %s6 = scalar_select 0, %s5, %s3
  $region1: #{tpu_custom_call.1} parent=0
    #allocation2 [shape = 'u8[8192]{0}', space=vmem, size = 0x2000, scoped, tag = 'input window, operand 0, single buffered']
    #allocation3 [shape = 's32[1]{0}', space=sflag, size = 0x4, scoped, tag = 'scoped memory for tpu_custom_call.1']
    #allocation4 [shape = 's32[1]{0}', space=sflag, size = 0x4, scoped, tag = 'scoped memory for tpu_custom_call.1']
    #allocation5 [shape = 'u8[4096]{0}', space=vmem, size = 0x1000, scoped, tag = 'input window, operand 1, single buffered']
    #allocation6 [shape = 's32[1]{0}', space=sflag, size = 0x4, scoped, tag = 'scoped memory for tpu_custom_call.1']
    #allocation7 [shape = 'u8[8192]{0}', space=vmem, size = 0x2000, scoped, tag = 'output window, operand 0, single buffered']
    %7 = vsyncpa [#allocation3], 0
    %8 = vsyncpa [#allocation6], 0
    %9 = vsyncpa [#allocation4], 0
    // Predicated region
    $region2: #{tpu_custom_call.1} parent=1 // pred_check
      _
    $region3: #{tpu_custom_call.1} parent=1 // pred_check_branch
      %11 = sbr.rel (0) target = $region5
    $region4: #{tpu_custom_call.1} parent=1 // pred_region
      %s13 = ssub.s32 256, 256
      %14 = vsyncadd [#allocation3], %s13
      %s16 = sshll.u32 [#allocation2], 4
      %s17 = int_to_ptr.vmem [resolvable:$true] %s16
      %19 = dma.hbm_to_vmem [thread:$0]  %s0, 256, %s17, [#allocation3]
    $region5: #{tpu_custom_call.1} parent=1 // pred_fallthru
      _
    // Predicated region
    $region6: #{tpu_custom_call.1} parent=1 // pred_check
      _
    $region7: #{tpu_custom_call.1} parent=1 // pred_check_branch
      %21 = sbr.rel (0) target = $region9
    $region8: #{tpu_custom_call.1} parent=1 // pred_region
      %s23 = ssub.s32 128, 128
      %24 = vsyncadd [#allocation6], %s23
      %s26 = sshll.u32 [#allocation5], 4
      %s27 = int_to_ptr.vmem [resolvable:$true] %s26
      %29 = dma.hbm_to_vmem [thread:$0]  %s1, 128, %s27, [#allocation6]
    $region9: #{tpu_custom_call.1} parent=1 // pred_fallthru
      _
    // Predicated region
    $region10: #{tpu_custom_call.1} parent=1 // pred_check
      _
    $region11: #{tpu_custom_call.1} parent=1 // pred_check_branch
      %31 = sbr.rel (0) target = $region13
    $region12: #{tpu_custom_call.1} parent=1 // pred_region
      %32 = dma.done [#allocation3], 256
    $region13: #{tpu_custom_call.1} parent=1 // pred_fallthru
      _
    // Predicated region
    $region14: #{tpu_custom_call.1} parent=1 // pred_check
      _
    $region15: #{tpu_custom_call.1} parent=1 // pred_check_branch
      %34 = sbr.rel (0) target = $region17
    $region16: #{tpu_custom_call.1} parent=1 // pred_region
      %35 = dma.done [#allocation6], 128
    $region17: #{tpu_custom_call.1} parent=1 // pred_fallthru
      _
    %v36 = vld [vmem:[#allocation2] sm:$0xff]
    %v37 = vld [vmem:[#allocation2 + $0x8] sm:$0xff]
    %v38 = vld [vmem:[#allocation5] sm:$0xff]
    %v40 = vlaneseq
    %v41 = vshrl.u32 %v40, 7
    %v42 = vsub.s32 0, %v41
    %v43 = vrot.slane %v38, %v42
    %v44 = vlaneseq
    %v45 = vshrl.u32 %v44, 7
    %v46 = vsub.s32 1, %v45
    %v47 = vrot.slane %v38, %v46
    %v48 = vlaneseq
    %v49 = vshrl.u32 %v48, 7
    %v50 = vsub.s32 2, %v49
    %v51 = vrot.slane %v38, %v50
    %v52 = vlaneseq
    %v53 = vshrl.u32 %v52, 7
    %v54 = vsub.s32 3, %v53
    %v55 = vrot.slane %v38, %v54
    %v56 = vlaneseq
    %v57 = vshrl.u32 %v56, 7
    %v58 = vsub.s32 4, %v57
    %v59 = vrot.slane %v38, %v58
    %v60 = vlaneseq
    %v61 = vshrl.u32 %v60, 7
    %v62 = vsub.s32 5, %v61
    %v63 = vrot.slane %v38, %v62
    %v64 = vlaneseq
    %v65 = vshrl.u32 %v64, 7
    %v66 = vsub.s32 6, %v65
    %v67 = vrot.slane %v38, %v66
    %v68 = vlaneseq
    %v69 = vshrl.u32 %v68, 7
    %v70 = vsub.s32 7, %v69
    %v71 = vrot.slane %v38, %v70
    %v72 = vcombine.low %v43, %v47
    %v73 = vcombine.low %v51, %v55
    %v75 = vunpack.c.l.s4 1983009808
    %v76 = vunpack.c.0.s8 %v75
    %v77 = vlaneseq
    %v78 = vshrl.u32 %v77, 7
    %v79 = vsub.s32 %v76, %v78
    %v80 = vrot.slane %v72, %v79
    %v82 = vunpack.c.l.s4 1983009808
    %v83 = vunpack.c.0.s8 %v82
    %v84 = vlaneseq
    %v85 = vshrl.u32 %v84, 7
    %v86 = vsub.s32 %v83, %v85
    %v87 = vrot.slane %v73, %v86
    %v88 = vcombine.low %v80, %v87
    %v89 = vcombine.low %v59, %v63
    %v90 = vcombine.low %v67, %v71
    %v92 = vunpack.c.l.s4 1983009808
    %v93 = vunpack.c.0.s8 %v92
    %v94 = vlaneseq
    %v95 = vshrl.u32 %v94, 7
    %v96 = vsub.s32 %v93, %v95
    %v97 = vrot.slane %v89, %v96
    %v99 = vunpack.c.l.s4 1983009808
    %v100 = vunpack.c.0.s8 %v99
    %v101 = vlaneseq
    %v102 = vshrl.u32 %v101, 7
    %v103 = vsub.s32 %v100, %v102
    %v104 = vrot.slane %v90, %v103
    %v105 = vcombine.low %v97, %v104
    %v108 = vadd.f32 %v36, %v88
    %v109 = vadd.f32 %v37, %v105
    %110 = vst [vmem:[#allocation7] sm:$0xff] %v108
    %111 = vst [vmem:[#allocation7 + $0x8] sm:$0xff] %v109
    // Predicated region
    $region18: #{tpu_custom_call.1} parent=1 // pred_check
      _
    $region19: #{tpu_custom_call.1} parent=1 // pred_check_branch
      %113 = sbr.rel (0) target = $region21
    $region20: #{tpu_custom_call.1} parent=1 // pred_region
      %s115 = ssub.s32 256, 256
      %116 = vsyncadd [#allocation4], %s115
      %s118 = sshll.u32 [#allocation7], 4
      %s119 = int_to_ptr.vmem [resolvable:$true] %s118
      %121 = dma.vmem_to_hbm [thread:$0]  %s119, 256, %s2, [#allocation4]
    $region21: #{tpu_custom_call.1} parent=1 // pred_fallthru
      _
    // Predicated region
    $region22: #{tpu_custom_call.1} parent=1 // pred_check
      _
    $region23: #{tpu_custom_call.1} parent=1 // pred_check_branch
      %123 = sbr.rel (0) target = $region25
    $region24: #{tpu_custom_call.1} parent=1 // pred_region
      %124 = dma.done [#allocation4], 256
    $region25: #{tpu_custom_call.1} parent=1 // pred_fallthru
      _
    %125 = vsyncpa [#allocation3], 1
    %126 = vsyncpa [#allocation6], 1
    %127 = vsyncpa [#allocation4], 1

</llo_original>
